<compile_context>
chip_gen: v6e
topology: v6e:2x2x1
jax: 0.10.0
libtpu: 0.0.40
codegen_flags: <defaults>
</compile_context>

<pallas_src>
import functools

import jax
import jax.numpy as jnp
from jax.experimental import pallas as pl
from jax.experimental.pallas import tpu as pltpu


# ---------------------------------------------------------------------------
# Fused Pallas kernel: conv3x3 + bias + ReLU + GAP + folded Linear/SNAC sum
# ---------------------------------------------------------------------------
def _grad_cam_fused_kernel(x_ref, w1_ref, b1_ref, w2_ref, out_ref, *,
                           H, W, C, TB):
    """TB batch elements per grid step, lane-dense layout.

    x_ref  : (TB, C, P)    zero-padded CHW image, spatially flattened,
                           P = (H+3)*(W+2) (pad: top 1, bottom 2, left/right 1)
    w1_ref : (C_mid, 9*C)  conv weight, column block k = di*3 + dj
    b1_ref : (C_mid, 1)    conv bias
    w2_ref : (C_mid, 1)    post_grad_cam Linear weight folded with the SNAC
                           half-selection sum and the 1/(H*W) pooling scale
    out_ref: (TB, 1, 128)  per-image scalar broadcast across 128 lanes
    """
    wp = W + 2
    L = H * wp

    w1 = w1_ref[...]                                      # (C_mid, 9C)
    b1 = b1_ref[...]                                      # (C_mid, 1)
    w2 = w2_ref[...]                                      # (C_mid, 1)

    # Valid-column mask (w' < W); the two wrap-around columns per flattened
    # row are garbage and must not contribute to the pooled sum.  Hoisted out
    # of the TB loop.
    col = jax.lax.broadcasted_iota(jnp.int32, (1, L), 1) % wp
    mask = (col < W).astype(jnp.float32)                  # (1, L)

    for b in range(TB):                                   # TB is small/static
        xb = x_ref[b]                                     # (C, P)

        # Stack the 9 shifted slabs -> one K = 9*C matmul on the MXU.
        slabs = []
        for di in range(3):
            for dj in range(3):
                start = di * wp + dj
                slabs.append(xb[:, start:start + L])      # (C, L) each
        stacked = jnp.concatenate(slabs, axis=0)          # (9*C, L)

        act = jnp.dot(w1, stacked,
                      preferred_element_type=jnp.float32)  # (C_mid, L)
        act = jnp.maximum(act + b1, 0.0) * mask           # bias + ReLU + mask

        pooled = jnp.sum(act, axis=1, keepdims=True)      # (C_mid, 1)
        s = jnp.sum(pooled * w2, axis=0, keepdims=True)   # (1, 1)
        out_ref[b, :, :] = jnp.broadcast_to(s, (1, 128))  # lane-dense store


# ---------------------------------------------------------------------------
# Wrapper
# ---------------------------------------------------------------------------
def grad_cam_forward(x, w1, b1, w2, b2, *, algo_name="SNAC", target="s"):
    """Equivalent of GradCam.forward(x, target); x is NCHW like PyTorch."""
    b, c, h, w = x.shape
    c_mid = w1.shape[0]
    f = w2.shape[0]
    wp = w + 2
    P = (h + 3) * wp

    if algo_name == "SNAC":
        if target not in ("s", "r"):
            raise ValueError(f"Unknown target: {target}")
        half = f // 2
        half_start = half if target == "s" else 0
        half_size = half
    else:
        half_start, half_size = 0, f

    # Batch tiling: keep exactly 2 grid steps (when B > 1) so v7x's two
    # TensorCores both get work; on v5e/v6e the extra step costs ~0.35us.
    steps = 1 if b <= 1 else 2
    tb = -(-b // steps)
    b_pad = steps * tb

    # Cheap XLA glue: zero pad batch (to steps*tb) and spatial dims (SAME conv
    # + 2 extra bottom rows so every shifted slab stays in range), flatten
    # spatial.  Channels -> sublane axis, flattened spatial -> lane axis.
    x_pad = jnp.pad(x.astype(jnp.float32),
                    ((0, b_pad - b), (0, 0), (1, 2), (1, 1)))
    x_flat = x_pad.reshape(b_pad, c, P)

    # Conv weight (C_mid, C, 3, 3) -> (C_mid, 3, 3, C) -> (C_mid, 9*C);
    # column block k = di*3 + dj matches the stacked-slab order in the kernel.
    w1_mat = jnp.transpose(w1, (0, 2, 3, 1)).reshape(c_mid, 9 * c)
    w1_mat = w1_mat.astype(jnp.float32)
    b1_col = b1.reshape(c_mid, 1).astype(jnp.float32)

    # Fold Linear + SNAC half-selection sum + 1/(H*W) pooling scale into one
    # (C_mid, 1) vector; the folded bias is a per-image constant added after.
    w2_sel = w2[half_start:half_start + half_size].astype(jnp.float32)
    w2_col = (jnp.sum(w2_sel, axis=0) / float(h * w)).reshape(c_mid, 1)
    b2_eff = jnp.sum(b2[half_start:half_start + half_size].astype(jnp.float32))

    kern = functools.partial(_grad_cam_fused_kernel, H=h, W=w, C=c, TB=tb)
    out = pl.pallas_call(
        kern,
        out_shape=jax.ShapeDtypeStruct((b_pad, 1, 128), jnp.float32),
        grid=(steps,),
        in_specs=[
            pl.BlockSpec((tb, c, P), lambda i: (i, 0, 0)),      # padded images
            pl.BlockSpec((c_mid, 9 * c), lambda i: (0, 0)),     # conv weight
            pl.BlockSpec((c_mid, 1), lambda i: (0, 0)),         # conv bias
            pl.BlockSpec((c_mid, 1), lambda i: (0, 0)),         # folded linear
        ],
        out_specs=pl.BlockSpec((tb, 1, 128), lambda i: (i, 0, 0)),
        compiler_params=pltpu.CompilerParams(
            dimension_semantics=("parallel",)),
    )(x_flat, w1_mat, b1_col, w2_col)

    vals = out[:b, 0, 0] + b2_eff                        # (B,)
    if algo_name == "SNAC":
        return vals
    return jnp.sum(vals)


# ---------------------------------------------------------------------------
# Pure-JAX reference (for verification)
# ---------------------------------------------------------------------------
def _ref_forward(x, w1, b1, w2, b2, algo_name, target):
    a = jax.lax.conv_general_dilated(
        x, w1, window_strides=(1, 1), padding="SAME",
        dimension_numbers=("NCHW", "OIHW", "NCHW"))
    a = jnp.maximum(a + b1[None, :, None, None], 0.0)
    pooled = jnp.mean(a, axis=(2, 3))
    y = pooled @ w2.T + b2
    if algo_name == "SNAC":
        half = y.shape[-1] // 2
        x_r, x_s = y[:, :half], y[:, half:]
        return jnp.sum(x_s if target == "s" else x_r, axis=-1)
    return jnp.sum(y)


# ---------------------------------------------------------------------------
if __name__ == "__main__":
    key = jax.random.PRNGKey(0)
    kx, kw1, kb1, kw2, kb2 = jax.random.split(key, 5)

    B, C, H, W = 2, 4, 16, 16          # input: NCHW
    C_MID, F = 8, 16                   # F even so SNAC split is well-defined

    x = jax.random.normal(kx, (B, C, H, W), jnp.float32)
    w1 = jax.random.normal(kw1, (C_MID, C, 3, 3), jnp.float32) * 0.1
    b1 = jax.random.normal(kb1, (C_MID,), jnp.float32) * 0.1
    w2 = jax.random.normal(kw2, (F, C_MID), jnp.float32) * 0.1
    b2 = jax.random.normal(kb2, (F,), jnp.float32) * 0.1

    # SNAC, target='s'
    out_s = grad_cam_forward(x, w1, b1, w2, b2, algo_name="SNAC", target="s")
    out_s = jax.block_until_ready(out_s)
    ref_s = _ref_forward(x, w1, b1, w2, b2, "SNAC", "s")
    assert out_s.shape == (B,), out_s.shape
    assert jnp.allclose(out_s, ref_s, atol=1e-4, rtol=1e-4), (out_s, ref_s)

    # SNAC, target='r'
    out_r = grad_cam_forward(x, w1, b1, w2, b2, algo_name="SNAC", target="r")
    out_r = jax.block_until_ready(out_r)
    ref_r = _ref_forward(x, w1, b1, w2, b2, "SNAC", "r")
    assert jnp.allclose(out_r, ref_r, atol=1e-4, rtol=1e-4), (out_r, ref_r)

    # non-SNAC (sum-everything) branch
    out_sum = grad_cam_forward(x, w1, b1, w2, b2, algo_name="other")
    out_sum = jax.block_until_ready(out_sum)
    ref_sum = _ref_forward(x, w1, b1, w2, b2, "other", "s")
    assert jnp.allclose(out_sum, ref_sum, atol=1e-4, rtol=1e-4), (out_sum, ref_sum)

    # Odd batch: exercises TB > 1 per grid step and batch padding.
    B2 = 5
    x5 = jax.random.normal(kx, (B2, C, H, W), jnp.float32)
    out5 = grad_cam_forward(x5, w1, b1, w2, b2, algo_name="SNAC", target="s")
    out5 = jax.block_until_ready(out5)
    ref5 = _ref_forward(x5, w1, b1, w2, b2, "SNAC", "s")
    assert out5.shape == (B2,), out5.shape
    assert jnp.allclose(out5, ref5, atol=1e-4, rtol=1e-4), (out5, ref5)

    print("KERNEL_OK")
</pallas_src>

<mosaic_0001>
module attributes {stable_mosaic.version = 11 : i64} {
  func.func @_grad_cam_fused_kernel(%arg0: i32, %arg1: memref<1x4x342xf32, #tpu.memory_space<vmem>>, %arg2: memref<8x36xf32, #tpu.memory_space<vmem>>, %arg3: memref<8x1xf32, #tpu.memory_space<vmem>>, %arg4: memref<8x1xf32, #tpu.memory_space<vmem>>, %arg5: memref<1x1x128xf32, #tpu.memory_space<vmem>>) attributes {dimension_semantics = [#tpu.dimension_semantics<parallel>], iteration_bounds = array<i64: 2>, scalar_prefetch = 0 : i64, scratch_operands = 0 : i64, tpu.core_type = #tpu.core_type<tc>, window_params = [{transform_indices = @transform_0, window_bounds = array<i64: 1, 4, 342>}, {pipeline_mode = #tpu.pipeline_mode<synchronous>, transform_indices = @transform_1, window_bounds = array<i64: 8, 36>}, {pipeline_mode = #tpu.pipeline_mode<synchronous>, transform_indices = @transform_2, window_bounds = array<i64: 8, 1>}, {pipeline_mode = #tpu.pipeline_mode<synchronous>, transform_indices = @transform_3, window_bounds = array<i64: 8, 1>}, {transform_indices = @transform_4, window_bounds = array<i64: 1, 1, 128>}]} {
    %c0 = arith.constant 0 : index
    %c0_0 = arith.constant 0 : index
    %0 = vector.load %arg2[%c0, %c0_0] : memref<8x36xf32, #tpu.memory_space<vmem>>, vector<8x36xf32>
    %c0_1 = arith.constant 0 : index
    %c0_2 = arith.constant 0 : index
    %1 = vector.load %arg3[%c0_1, %c0_2] : memref<8x1xf32, #tpu.memory_space<vmem>>, vector<8x1xf32>
    %c0_3 = arith.constant 0 : index
    %c0_4 = arith.constant 0 : index
    %2 = vector.load %arg4[%c0_3, %c0_4] : memref<8x1xf32, #tpu.memory_space<vmem>>, vector<8x1xf32>
    %3 = tpu.iota {dimensions = array<i32: 1>} : vector<1x288xi32>
    %c18_i32 = arith.constant 18 : i32
    %c0_i32 = arith.constant 0 : i32
    %4 = arith.cmpi eq, %c18_i32, %c0_i32 : i32
    %c1_i32 = arith.constant 1 : i32
    %5 = arith.select %4, %c1_i32, %c18_i32 : i32
    %6 = vector.broadcast %5 : i32 to vector<1x288xi32>
    %7 = arith.remsi %3, %6 : vector<1x288xi32>
    %c0_i32_5 = arith.constant 0 : i32
    %8 = vector.broadcast %c0_i32_5 : i32 to vector<1x288xi32>
    %9 = arith.cmpi ne, %7, %8 : vector<1x288xi32>
    %c0_i32_6 = arith.constant 0 : i32
    %10 = vector.broadcast %c0_i32_6 : i32 to vector<1x288xi32>
    %11 = arith.cmpi slt, %7, %10 : vector<1x288xi32>
    %c0_i32_7 = arith.constant 0 : i32
    %12 = arith.cmpi slt, %5, %c0_i32_7 : i32
    %13 = vector.broadcast %12 : i1 to vector<1x288xi1>
    %14 = vector.broadcast %13 : vector<1x288xi1> to vector<1x288xi1>
    %15 = arith.xori %11, %14 : vector<1x288xi1>
    %16 = arith.andi %15, %9 : vector<1x288xi1>
    %17 = vector.broadcast %5 : i32 to vector<1x288xi32>
    %18 = arith.addi %7, %17 : vector<1x288xi32>
    %19 = arith.select %16, %18, %7 : vector<1x288xi1>, vector<1x288xi32>
    %c16_i32 = arith.constant 16 : i32
    %20 = vector.broadcast %c16_i32 : i32 to vector<1x288xi32>
    %21 = arith.cmpi slt, %19, %20 : vector<1x288xi32>
    %22 = arith.extui %21 : vector<1x288xi1> to vector<1x288xi32>
    %23 = arith.sitofp %22 : vector<1x288xi32> to vector<1x288xf32>
    %c0_8 = arith.constant 0 : index
    %c0_9 = arith.constant 0 : index
    %c0_10 = arith.constant 0 : index
    %24 = vector.load %arg1[%c0_8, %c0_9, %c0_10] : memref<1x4x342xf32, #tpu.memory_space<vmem>>, vector<1x4x342xf32>
    %25 = vector.shape_cast %24 : vector<1x4x342xf32> to vector<4x342xf32>
    %26 = vector.extract_strided_slice %25 {offsets = [0, 0], sizes = [4, 288], strides = [1, 1]} : vector<4x342xf32> to vector<4x288xf32>
    %27 = vector.extract_strided_slice %25 {offsets = [0, 1], sizes = [4, 288], strides = [1, 1]} : vector<4x342xf32> to vector<4x288xf32>
    %28 = vector.extract_strided_slice %25 {offsets = [0, 2], sizes = [4, 288], strides = [1, 1]} : vector<4x342xf32> to vector<4x288xf32>
    %29 = vector.extract_strided_slice %25 {offsets = [0, 18], sizes = [4, 288], strides = [1, 1]} : vector<4x342xf32> to vector<4x288xf32>
    %30 = vector.extract_strided_slice %25 {offsets = [0, 19], sizes = [4, 288], strides = [1, 1]} : vector<4x342xf32> to vector<4x288xf32>
    %31 = vector.extract_strided_slice %25 {offsets = [0, 20], sizes = [4, 288], strides = [1, 1]} : vector<4x342xf32> to vector<4x288xf32>
    %32 = vector.extract_strided_slice %25 {offsets = [0, 36], sizes = [4, 288], strides = [1, 1]} : vector<4x342xf32> to vector<4x288xf32>
    %33 = vector.extract_strided_slice %25 {offsets = [0, 37], sizes = [4, 288], strides = [1, 1]} : vector<4x342xf32> to vector<4x288xf32>
    %34 = vector.extract_strided_slice %25 {offsets = [0, 38], sizes = [4, 288], strides = [1, 1]} : vector<4x342xf32> to vector<4x288xf32>
    %35 = tpu.concatenate %26, %27, %28, %29, %30, %31, %32, %33, %34 in 0 : vector<4x288xf32>, vector<4x288xf32>, vector<4x288xf32>, vector<4x288xf32>, vector<4x288xf32>, vector<4x288xf32>, vector<4x288xf32>, vector<4x288xf32>, vector<4x288xf32> -> vector<36x288xf32>
    %cst = arith.constant dense<0.000000e+00> : vector<8x288xf32>
    %36 = tpu.matmul %0, %35, %cst {dimension_numbers = #tpu.dot_dimension_numbers<[1], [0], [0], [1], [0, 0, 1, 1], [], []>} : vector<8x36xf32>, vector<36x288xf32>, vector<8x288xf32> -> vector<8x288xf32>
    %37 = vector.broadcast %1 : vector<8x1xf32> to vector<8x288xf32>
    %38 = arith.addf %36, %37 : vector<8x288xf32>
    %cst_11 = arith.constant 0.000000e+00 : f32
    %39 = vector.broadcast %cst_11 : f32 to vector<8x288xf32>
    %40 = arith.maximumf %38, %39 : vector<8x288xf32>
    %41 = vector.broadcast %23 : vector<1x288xf32> to vector<8x288xf32>
    %42 = arith.mulf %40, %41 : vector<8x288xf32>
    %cst_12 = arith.constant dense<0.000000e+00> : vector<8xf32>
    %43 = vector.multi_reduction <add>, %42, %cst_12 [1] : vector<8x288xf32> to vector<8xf32>
    %44 = vector.shape_cast %43 : vector<8xf32> to vector<8x1xf32>
    %45 = arith.mulf %44, %2 : vector<8x1xf32>
    %cst_13 = arith.constant dense<0.000000e+00> : vector<1xf32>
    %46 = vector.multi_reduction <add>, %45, %cst_13 [0] : vector<8x1xf32> to vector<1xf32>
    %47 = vector.shape_cast %46 : vector<1xf32> to vector<1x1xf32>
    %48 = vector.shape_cast %47 : vector<1x1xf32> to vector<1x1xf32>
    %49 = vector.broadcast %48 : vector<1x1xf32> to vector<1x128xf32>
    %c0_14 = arith.constant 0 : index
    %c0_15 = arith.constant 0 : index
    %c0_16 = arith.constant 0 : index
    %50 = vector.load %arg5[%c0_14, %c0_15, %c0_16] : memref<1x1x128xf32, #tpu.memory_space<vmem>>, vector<1x1x128xf32>
    %51 = vector.shape_cast %50 : vector<1x1x128xf32> to vector<1x128xf32>
    %52 = vector.shape_cast %49 : vector<1x128xf32> to vector<1x1x128xf32>
    tpu.vector_store %arg5[%c0_14, %c0_15, %c0_16], %52 {strides = array<i32>} : memref<1x1x128xf32, #tpu.memory_space<vmem>>, vector<1x1x128xf32>,
    return
  }
  func.func @transform_0(%arg0: i32) -> (i32, i32, i32) {
    %c0_i32 = arith.constant 0 : i32
    %c0_i32_0 = arith.constant 0 : i32
    %c0_i32_1 = arith.constant 0 : i32
    return %arg0, %c0_i32, %c0_i32_0 : i32, i32, i32
  }
  func.func @transform_1(%arg0: i32) -> (i32, i32) {
    %c0_i32 = arith.constant 0 : i32
    %c0_i32_0 = arith.constant 0 : i32
    %c0_i32_1 = arith.constant 0 : i32
    return %c0_i32, %c0_i32_0 : i32, i32
  }
  func.func @transform_2(%arg0: i32) -> (i32, i32) {
    %c0_i32 = arith.constant 0 : i32
    %c0_i32_0 = arith.constant 0 : i32
    %c0_i32_1 = arith.constant 0 : i32
    return %c0_i32, %c0_i32_0 : i32, i32
  }
  func.func @transform_3(%arg0: i32) -> (i32, i32) {
    %c0_i32 = arith.constant 0 : i32
    %c0_i32_0 = arith.constant 0 : i32
    %c0_i32_1 = arith.constant 0 : i32
    return %c0_i32, %c0_i32_0 : i32, i32
  }
  func.func @transform_4(%arg0: i32) -> (i32, i32, i32) {
    %c0_i32 = arith.constant 0 : i32
    %c0_i32_0 = arith.constant 0 : i32
    %c0_i32_1 = arith.constant 0 : i32
    return %arg0, %c0_i32, %c0_i32_0 : i32, i32, i32
  }
}

</mosaic_0001>

<llo_original>
// kernel: tpu_custom_call.1
$region0: #{tpu_custom_call.1}
  #allocation0 [shape = 'u32[]', space=smem, size = 0x4, offset = 0x4, fixed_abs, tag = 'smem constant byte address 0x4 - core index']
  #allocation1 [shape = 'u32[144,128]{1,0:T(1,128)}', space=vmem, size = 0x12000, scoped, tag = 'internal scratch']
  %s0 = inlined_call_operand.hbm [shape: f32[2,4,342], index: 0, kind: input, shape index: {}]
  %s1 = inlined_call_operand.vmem [shape: f32[8,36], index: 1, kind: input, shape index: {}]
  %s2 = inlined_call_operand.vmem [shape: f32[8,1], index: 2, kind: input, shape index: {}]
  %s3 = inlined_call_operand.vmem [shape: f32[8,1], index: 3, kind: input, shape index: {}]
  %s4 = inlined_call_operand.hbm [shape: f32[2,1,128], index: 4, kind: output, shape index: {}]
  %s5 = sld [smem:[#allocation0]]
  $region53: #{tpu_custom_call.1} parent=0
    _
  %s7 = ssub.s32 1, %s5
  %s8 = scalar_select 0, %s7, %s5
  $region1: #{tpu_custom_call.1} parent=0
    #allocation2 [shape = 'u8[12288]{0}', space=vmem, size = 0x3000, scoped, tag = 'input window, operand 0']
    #allocation3 [shape = 's32[2]{0}', space=sflag, size = 0x8, scoped, tag = 'scoped memory for tpu_custom_call.1']
    #allocation4 [shape = 's32[2]{0}', space=sflag, size = 0x8, scoped, tag = 'scoped memory for tpu_custom_call.1']
    #allocation5 [shape = 'u8[1024]{0}', space=vmem, size = 0x400, scoped, tag = 'output window, operand 0']
    %9 = vsyncpa [#allocation3], 0
    %s10 = scalar_lea.sflag [#allocation3], 1
    %11 = vsyncpa %s10, 0
    %12 = vsyncpa [#allocation4], 0
    %s13 = scalar_lea.sflag [#allocation4], 1
    %14 = vsyncpa %s13, 0
    loop: start=0, step=1, limit=4
    $region2: #{tpu_custom_call.1} parent=1 // loop_pre_header
      _
    $region3: #{tpu_custom_call.1} parent=1 // loop_header
      %s16 = sphi 0, %s20
      %p17 = scmp.ge.s32.totalorder %s16, 4
      %s26 = sphi 0, %s28
      %s29 = sphi 0, %s26
      %s30 = sphi 0, %s29
      %s46 = sphi 0, %s30
      %s50 = sphi 0, %s50
      %s52 = sphi 0, %s50
      %s53 = sphi 0, %s52
      %s67 = sphi 0, %s53
      %s71 = sphi 0, %s71
      %s73 = sphi 0, %s71
      %s74 = sphi 0, %s73
      %s88 = sphi 0, %s74
      %s92 = sphi 0, %s92
      %s94 = sphi 0, %s92
      %s95 = sphi 0, %s94
      %s109 = sphi 0, %s95
      %s115 = sphi 0, %s117
      %s118 = sphi 0, %s115
      %s119 = sphi 0, %s118
      %s135 = sphi 0, %s119
    $region4: #{tpu_custom_call.1} parent=1 // loop_header_branch
      %19 = sbr.rel (%p17) target = $region8
    $region5: #{tpu_custom_call.1} parent=1 // loop_body
      %s21 = ssub.s32 %s16, 1
      %s22 = ssub.s32 %s16, 2
      %s23 = sadd.s32 %s16, 1
      %s24 = ssub.s32 %s16, %s23
      %p25 = scmp.eq.s32.totalorder %s24, 0
      %s27 = sadd.s32 %s26, 1
      %s28 = scalar_select %p25, %s26, %s27
      %p31 = pneg %p25
      %p32 = scmp.eq.s32.totalorder %s16, 1
      %p33 = por %p31, %p32
      %p34 = scmp.ne.s32.totalorder %s26, %s29
      %p35 = scmp.eq.s32.totalorder %s16, 0
      %p36 = por %p34, %p35
      %p37 = scmp.ne.s32.totalorder %s26, %s29
      %p38 = scmp.eq.s32.totalorder %s21, 1
      %p39 = por %p37, %p38
      %p40 = scmp.ne.s32.totalorder %s29, %s30
      %p41 = scmp.eq.s32.totalorder %s21, 0
      %p42 = por %p40, %p41
      %p43 = scmp.ne.s32.totalorder %s29, %s30
      %p44 = scmp.eq.s32.totalorder %s22, 1
      %p45 = por %p43, %p44
      %p47 = scmp.ne.s32.totalorder %s30, %s46
      %p48 = scmp.eq.s32.totalorder %s22, 0
      %p49 = por %p47, %p48
      %s51 = sadd.s32 %s50, 1
      %p54 = scmp.eq.s32.totalorder %s16, 1
      %p55 = scmp.ne.s32.totalorder %s50, %s52
      %p56 = scmp.eq.s32.totalorder %s16, 0
      %p57 = por %p55, %p56
      %p58 = scmp.ne.s32.totalorder %s50, %s52
      %p59 = scmp.eq.s32.totalorder %s21, 1
      %p60 = por %p58, %p59
      %p61 = scmp.ne.s32.totalorder %s52, %s53
      %p62 = scmp.eq.s32.totalorder %s21, 0
      %p63 = por %p61, %p62
      %p64 = scmp.ne.s32.totalorder %s52, %s53
      %p65 = scmp.eq.s32.totalorder %s22, 1
      %p66 = por %p64, %p65
      %p68 = scmp.ne.s32.totalorder %s53, %s67
      %p69 = scmp.eq.s32.totalorder %s22, 0
      %p70 = por %p68, %p69
      %s72 = sadd.s32 %s71, 1
      %p75 = scmp.eq.s32.totalorder %s16, 1
      %p76 = scmp.ne.s32.totalorder %s71, %s73
      %p77 = scmp.eq.s32.totalorder %s16, 0
      %p78 = por %p76, %p77
      %p79 = scmp.ne.s32.totalorder %s71, %s73
      %p80 = scmp.eq.s32.totalorder %s21, 1
      %p81 = por %p79, %p80
      %p82 = scmp.ne.s32.totalorder %s73, %s74
      %p83 = scmp.eq.s32.totalorder %s21, 0
      %p84 = por %p82, %p83
      %p85 = scmp.ne.s32.totalorder %s73, %s74
      %p86 = scmp.eq.s32.totalorder %s22, 1
      %p87 = por %p85, %p86
      %p89 = scmp.ne.s32.totalorder %s74, %s88
      %p90 = scmp.eq.s32.totalorder %s22, 0
      %p91 = por %p89, %p90
      %s93 = sadd.s32 %s92, 1
      %p96 = scmp.eq.s32.totalorder %s16, 1
      %p97 = scmp.ne.s32.totalorder %s92, %s94
      %p98 = scmp.eq.s32.totalorder %s16, 0
      %p99 = por %p97, %p98
      %p100 = scmp.ne.s32.totalorder %s92, %s94
      %p101 = scmp.eq.s32.totalorder %s21, 1
      %p102 = por %p100, %p101
      %p103 = scmp.ne.s32.totalorder %s94, %s95
      %p104 = scmp.eq.s32.totalorder %s21, 0
      %p105 = por %p103, %p104
      %p106 = scmp.ne.s32.totalorder %s94, %s95
      %p107 = scmp.eq.s32.totalorder %s22, 1
      %p108 = por %p106, %p107
      %p110 = scmp.ne.s32.totalorder %s95, %s109
      %p111 = scmp.eq.s32.totalorder %s22, 0
      %p112 = por %p110, %p111
      %s113 = ssub.s32 %s16, %s23
      %p114 = scmp.eq.s32.totalorder %s113, 0
      %s116 = sadd.s32 %s115, 1
      %s117 = scalar_select %p114, %s115, %s116
      %p120 = pneg %p114
      %p121 = scmp.eq.s32.totalorder %s16, 1
      %p122 = por %p120, %p121
      %p123 = scmp.ne.s32.totalorder %s115, %s118
      %p124 = scmp.eq.s32.totalorder %s16, 0
      %p125 = por %p123, %p124
      %p126 = scmp.ne.s32.totalorder %s115, %s118
      %p127 = scmp.eq.s32.totalorder %s21, 1
      %p128 = por %p126, %p127
      %p129 = scmp.ne.s32.totalorder %s118, %s119
      %p130 = scmp.eq.s32.totalorder %s21, 0
      %p131 = por %p129, %p130
      %p132 = scmp.ne.s32.totalorder %s118, %s119
      %p133 = scmp.eq.s32.totalorder %s22, 1
      %p134 = por %p132, %p133
      %p136 = scmp.ne.s32.totalorder %s119, %s135
      %p137 = scmp.eq.s32.totalorder %s22, 0
      %p138 = por %p136, %p137
      %p139 = scmp.le.s32.totalorder 1, %s16
      %p140 = scmp.lt.s32.totalorder %s16, 3
      %p141 = pnand %p139, %p140
      %p142 = pneg %p141
      // Predicated region
      $region9: #{tpu_custom_call.1} parent=5 // pred_check
        _
      $region10: #{tpu_custom_call.1} parent=5 // pred_check_branch
        %144 = sbr.rel (%p141) target = $region12
      $region11: #{tpu_custom_call.1} parent=5 // pred_region
        %s145 = ssub.s32 %s16, 1
        // Predicated region
        $region13: #{tpu_custom_call.1} parent=11 // pred_check
          %p146 = pneg %p63
        $region14: #{tpu_custom_call.1} parent=11 // pred_check_branch
          %148 = sbr.rel (%p146) target = $region16
        $region15: #{tpu_custom_call.1} parent=11 // pred_region
          _
        $region16: #{tpu_custom_call.1} parent=11 // pred_fallthru
          _
        // Predicated region
        $region17: #{tpu_custom_call.1} parent=11 // pred_check
          %p149 = pneg %p84
        $region18: #{tpu_custom_call.1} parent=11 // pred_check_branch
          %151 = sbr.rel (%p149) target = $region20
        $region19: #{tpu_custom_call.1} parent=11 // pred_region
          _
        $region20: #{tpu_custom_call.1} parent=11 // pred_fallthru
          _
        // Predicated region
        $region21: #{tpu_custom_call.1} parent=11 // pred_check
          %p152 = pneg %p105
        $region22: #{tpu_custom_call.1} parent=11 // pred_check_branch
          %154 = sbr.rel (%p152) target = $region24
        $region23: #{tpu_custom_call.1} parent=11 // pred_region
          _
        $region24: #{tpu_custom_call.1} parent=11 // pred_fallthru
          _
      $region12: #{tpu_custom_call.1} parent=5 // pred_fallthru
        _
      %p155 = scmp.lt.s32.totalorder %s16, 2
      // Predicated region
      $region25: #{tpu_custom_call.1} parent=5 // pred_check
        %p156 = pneg %p155
      $region26: #{tpu_custom_call.1} parent=5 // pred_check_branch
        %158 = sbr.rel (%p156) target = $region28
      $region27: #{tpu_custom_call.1} parent=5 // pred_region
        // Predicated region
        $region29: #{tpu_custom_call.1} parent=27 // pred_check
          %p159 = pneg %p36
        $region30: #{tpu_custom_call.1} parent=27 // pred_check_branch
          %161 = sbr.rel (%p159) target = $region32
        $region31: #{tpu_custom_call.1} parent=27 // pred_region
          %s162 = sand.u32 %s26, 1
          %s163 = scalar_lea.sflag [#allocation3], %s162
          %s164 = sand.u32 %s26, 1
          %s165 = smul.addr %s164, 12
          %s166 = scalar_lea.vmem [#allocation2], %s165
          %s168 = ssub.s32 192, 192
          %169 = vsyncadd %s163, %s168
          %s170 = smul.addr %s16, 3
          %s171 = smul.addr %s170, 64
          %s172 = scalar_lea.hbm %s0, %s171
          %s174 = sshll.u32 %s166, 4
          %s175 = int_to_ptr.vmem [resolvable:$true] %s174
          %177 = dma.hbm_to_vmem [thread:$0]  %s172, 192, %s175, %s163
        $region32: #{tpu_custom_call.1} parent=27 // pred_fallthru
          _
      $region28: #{tpu_custom_call.1} parent=5 // pred_fallthru
        _
      %p178 = scmp.le.s32.totalorder 1, %s16
      %p179 = scmp.lt.s32.totalorder %s16, 3
      %p180 = pnand %p178, %p179
      %p181 = pneg %p180
      // Predicated region
      $region33: #{tpu_custom_call.1} parent=5 // pred_check
        _
      $region34: #{tpu_custom_call.1} parent=5 // pred_check_branch
        %183 = sbr.rel (%p180) target = $region36
      $region35: #{tpu_custom_call.1} parent=5 // pred_region
        %s184 = ssub.s32 %s16, 1
        %s185 = sand.u32 %s29, 1
        %s186 = scalar_lea.sflag [#allocation3], %s185
        %s187 = sand.u32 %s29, 1
        %s188 = smul.addr %s187, 12
        %s189 = scalar_lea.vmem [#allocation2], %s188
        // Predicated region
        $region37: #{tpu_custom_call.1} parent=35 // pred_check
          %p190 = pneg %p42
        $region38: #{tpu_custom_call.1} parent=35 // pred_check_branch
          %192 = sbr.rel (%p190) target = $region40
        $region39: #{tpu_custom_call.1} parent=35 // pred_region
          %193 = dma.done %s186, 192
        $region40: #{tpu_custom_call.1} parent=35 // pred_fallthru
          _
        %s194 = sand.u32 %s29, 1
        %s195 = scalar_lea.sflag [#allocation3], %s194
        %s196 = sand.u32 %s29, 1
        %s197 = smul.addr %s196, 12
        %s198 = scalar_lea.vmem [#allocation2], %s197
        %p199 = pneg %p42
        %p200 = pneg %p39
        %p201 = pneg %p63
        %p202 = pneg %p60
        %p203 = pneg %p84
        %p204 = pneg %p81
        %p205 = pneg %p105
        %p206 = pneg %p102
        %p207 = pneg %p131
        %p208 = pneg %p128
        %s209 = sand.u32 %s118, 1
        %s210 = scalar_lea.sflag [#allocation4], %s209
        %s211 = sand.u32 %s118, 1
        %s212 = scalar_lea.vmem [#allocation5], %s211
        %v213 = vld [vmem:[%s1] sm:$0xff]
        %v214 = vld [vmem:[%s2] sm:$0xff]
        %v215 = vld [vmem:[%s3] sm:$0xff]
        %v216 = vlaneseq
        %v217 = vand.u32 %v216, 127
        %v218 = vadd.s32 %v217, 128
        %v219 = vadd.s32 %v217, 256
        %vm220 = vcmp.lt.s32.totalorder %v217, 0
        %v221 = vsub.s32 0, %v217
        %v222 = vsel %vm220, %v221, %v217
        %v223 = vmul.u32.u64.compose %v222, 3817748708
        %v224 = vextract.low.u32 %v223
        %v225 = vextract.high.u32 %v223
        %v226 = vshrl.u32 %v225, 4
        %v227 = vmul.u32 %v226, 18
        %v228 = vsub.s32 %v222, %v227
        %v229 = vsub.s32 0, %v228
        %v230 = vsel %vm220, %v229, %v228
        %vm231 = vcmp.lt.s32.totalorder %v218, 0
        %v232 = vsub.s32 0, %v218
        %v233 = vsel %vm231, %v232, %v218
        %v234 = vmul.u32.u64.compose %v233, 3817748708
        %v235 = vextract.low.u32 %v234
        %v236 = vextract.high.u32 %v234
        %v237 = vshrl.u32 %v236, 4
        %v238 = vmul.u32 %v237, 18
        %v239 = vsub.s32 %v233, %v238
        %v240 = vsub.s32 0, %v239
        %v241 = vsel %vm231, %v240, %v239
        %vm242 = vcmp.lt.s32.totalorder %v219, 0
        %v243 = vsub.s32 0, %v219
        %v244 = vsel %vm242, %v243, %v219
        %v245 = vmul.u32.u64.compose %v244, 3817748708
        %v246 = vextract.low.u32 %v245
        %v247 = vextract.high.u32 %v245
        %v248 = vshrl.u32 %v247, 4
        %v249 = vmul.u32 %v248, 18
        %v250 = vsub.s32 %v244, %v249
        %v251 = vsub.s32 0, %v250
        %v252 = vsel %vm242, %v251, %v250
        %vm253 = vcmp.ne.s32.totalorder %v230, 0
        %vm254 = vcmp.ne.s32.totalorder %v241, 0
        %vm255 = vcmp.ne.s32.totalorder %v252, 0
        %vm256 = vcmp.lt.s32.totalorder %v230, 0
        %vm257 = vcmp.lt.s32.totalorder %v241, 0
        %vm258 = vcmp.lt.s32.totalorder %v252, 0
        %vm259 = vmand %vm256, %vm253
        %vm260 = vmand %vm257, %vm254
        %vm261 = vmand %vm258, %vm255
        %v262 = vadd.s32 %v230, 18
        %v263 = vadd.s32 %v241, 18
        %v264 = vadd.s32 %v252, 18
        %v265 = vsel %vm259, %v262, %v230
        %v266 = vsel %vm260, %v263, %v241
        %v267 = vsel %vm261, %v264, %v252
        %vm268 = vcmp.lt.s32.totalorder %v265, 16
        %vm269 = vcmp.lt.s32.totalorder %v266, 16
        %vm270 = vcmp.lt.s32.totalorder %v267, 16
        %v271 = vsel %vm268, 1, 0
        %v272 = vsel %vm269, 1, 0
        %v273 = vsel %vm270, 1, 0
        %v274 = vcvt.s32.f32 %v271
        %v275 = vcvt.s32.f32 %v272
        %v276 = vcvt.s32.f32 %v273
        %v277 = vld [vmem:[%s189] sm:$0xff]
        %v278 = vld [vmem:[%s189 + $0x8] sm:$0xf]
        %v281 = vcombine.high %v277, %v277
        %v283 = vcombine.low %v277, %v277
        %v284 = vcombine.low %v278, %v278
        %285 = vrot.lane.b32.xlu0 %v283, 127
        %v286 = vpop.permute.xlu0 %285
        %287 = vrot.lane.b32.xlu0 %v277, 127
        %v288 = vpop.permute.xlu0 %287
        %289 = vrot.lane.b32.xlu0 %v284, 127
        %v290 = vpop.permute.xlu0 %289
        %vm291 = vcmask 1039360
        %v292 = vsel %vm291, %v286, %v288
        %v293 = vsel %vm291, %v288, %v290
        %297 = vrot.lane.b32.xlu0 %v277, 126
        %v298 = vpop.permute.xlu0 %297
        %299 = vrot.lane.b32.xlu0 %v281, 126
        %v300 = vpop.permute.xlu0 %299
        %301 = vrot.lane.b32.xlu0 %v278, 126
        %v302 = vpop.permute.xlu0 %301
        %vm303 = vcmask 1031168
        %v304 = vsel %vm303, %v298, %v300
        %v305 = vsel %vm303, %v300, %v302
        %309 = vrot.lane.b32.xlu0 %v283, 110
        %v310 = vpop.permute.xlu0 %309
        %311 = vrot.lane.b32.xlu0 %v277, 110
        %v312 = vpop.permute.xlu0 %311
        %313 = vrot.lane.b32.xlu0 %v284, 110
        %v314 = vpop.permute.xlu0 %313
        %vm315 = vcmask 900096
        %v316 = vsel %vm315, %v310, %v312
        %v317 = vsel %vm315, %v312, %v314
        %321 = vrot.lane.b32.xlu0 %v277, 109
        %v322 = vpop.permute.xlu0 %321
        %323 = vrot.lane.b32.xlu0 %v281, 109
        %v324 = vpop.permute.xlu0 %323
        %325 = vrot.lane.b32.xlu0 %v278, 109
        %v326 = vpop.permute.xlu0 %325
        %vm327 = vcmask 891904
        %v328 = vsel %vm327, %v322, %v324
        %v329 = vsel %vm327, %v324, %v326
        %333 = vrot.lane.b32.xlu0 %v283, 108
        %v334 = vpop.permute.xlu0 %333
        %335 = vrot.lane.b32.xlu0 %v277, 108
        %v336 = vpop.permute.xlu0 %335
        %337 = vrot.lane.b32.xlu0 %v284, 108
        %v338 = vpop.permute.xlu0 %337
        %vm339 = vcmask 883712
        %v340 = vsel %vm339, %v334, %v336
        %v341 = vsel %vm339, %v336, %v338
        %345 = vrot.lane.b32.xlu0 %v277, 92
        %v346 = vpop.permute.xlu0 %345
        %347 = vrot.lane.b32.xlu0 %v281, 92
        %v348 = vpop.permute.xlu0 %347
        %349 = vrot.lane.b32.xlu0 %v278, 92
        %v350 = vpop.permute.xlu0 %349
        %vm351 = vcmask 752640
        %v352 = vsel %vm351, %v346, %v348
        %v353 = vsel %vm351, %v348, %v350
        %357 = vrot.lane.b32.xlu0 %v283, 91
        %v358 = vpop.permute.xlu0 %357
        %359 = vrot.lane.b32.xlu0 %v277, 91
        %v360 = vpop.permute.xlu0 %359
        %361 = vrot.lane.b32.xlu0 %v284, 91
        %v362 = vpop.permute.xlu0 %361
        %vm363 = vcmask 744448
        %v364 = vsel %vm363, %v358, %v360
        %v365 = vsel %vm363, %v360, %v362
        %369 = vrot.lane.b32.xlu0 %v277, 90
        %v370 = vpop.permute.xlu0 %369
        %371 = vrot.lane.b32.xlu0 %v281, 90
        %v372 = vpop.permute.xlu0 %371
        %373 = vrot.lane.b32.xlu0 %v278, 90
        %v374 = vpop.permute.xlu0 %373
        %vm375 = vcmask 736256
        %v376 = vsel %vm375, %v370, %v372
        %v377 = vsel %vm375, %v372, %v374
        %vm378 = vcmask 1043456
        %v379 = vsel %vm378, %v277, %v292
        %v380 = vsel %vm378, %v281, %v293
        %v381 = vsel %vm378, %v278, %v290
        %v382 = vsel %vm378, %v304, %v316
        %v383 = vsel %vm378, %v305, %v317
        %v384 = vsel %vm378, %v302, %v314
        %v385 = vsel %vm378, %v328, %v340
        %v386 = vsel %vm378, %v329, %v341
        %v387 = vsel %vm378, %v326, %v338
        %v388 = vsel %vm378, %v352, %v364
        %v389 = vsel %vm378, %v353, %v365
        %v390 = vsel %vm378, %v350, %v362
        %392 = vset.pattern.permute.xlu0 0
        %393 = vperm.xlu0 %392, %v214
        %v394 = vpop.permute.xlu0 %393
        %vm396 = vcmask 293888
        %v398 = vsel %vm396, %v213, 0
        %v400 = vsel %vm378, %v376, 0
        %v402 = vsel %vm378, %v377, 0
        %v404 = vsel %vm378, %v374, 0
        %406 = vmatprep.subr.mxu0 0.0
        %407 = vmatpush1.msra.mxu0 0.0
        %408 = vmatprep.subr.mxu0 0.0
        %409 = vmatpush1.msra.mxu0 0.0
        %410 = vmatprep.subr.mxu0 0.0
        %411 = vmatpush1.msra.mxu0 0.0
        %412 = vmatprep.subr.mxu0 0.0
        %413 = vmatpush1.msra.mxu0 0.0
        %414 = vmatprep.subr.mxu0 0.0
        %415 = vmatpush1.msra.mxu0 0.0
        %416 = vmatprep.subr.mxu0 0.0
        %417 = vmatpush1.msra.mxu0 0.0
        %418 = vmatprep.subr.mxu0 0.0
        %419 = vmatpush1.msra.mxu0 0.0
        %420 = vmatprep.subr.mxu0 0.0
        %421 = vmatpush1.msra.mxu0 0.0
        %422 = vmatprep.subr.mxu0 0.0
        %423 = vmatpush1.msra.mxu0 0.0
        %424 = vmatprep.subr.mxu0 0.0
        %425 = vmatpush1.msra.mxu0 0.0
        %426 = vmatprep.subr.mxu0 0.0
        %427 = vmatpush1.msra.mxu0 0.0
        %428 = vmatprep.subr.mxu0 %v402
        %429 = vmatpush1.msra.mxu0 %v400
        %430 = vmatprep.subr.mxu0 %v389
        %431 = vmatpush1.msra.mxu0 %v388
        %432 = vmatprep.subr.mxu0 %v386
        %433 = vmatpush1.msra.mxu0 %v385
        %434 = vmatprep.subr.mxu0 %v383
        %435 = vmatpush1.msra.mxu0 %v382
        %436 = vmatprep.subr.mxu0 %v380
        %437 = vmatpush1.msra.mxu0 %v379
        %438 = vmatprep.subr.mxu0 0.0
        %439 = vmatpush2.msra.mxu0 0.0
        %440 = vmatprep.subr.mxu0 0.0
        %441 = vmatpush2.msra.mxu0 0.0
        %442 = vmatprep.subr.mxu0 0.0
        %443 = vmatpush2.msra.mxu0 0.0
        %444 = vmatprep.subr.mxu0 0.0
        %445 = vmatpush2.msra.mxu0 0.0
        %446 = vmatprep.subr.mxu0 0.0
        %447 = vmatpush2.msra.mxu0 0.0
        %448 = vmatprep.subr.mxu0 0.0
        %449 = vmatpush2.msra.mxu0 0.0
        %450 = vmatprep.subr.mxu0 0.0
        %451 = vmatpush2.msra.mxu0 0.0
        %452 = vmatprep.subr.mxu0 0.0
        %453 = vmatpush2.msra.mxu0 0.0
        %454 = vmatprep.subr.mxu0 0.0
        %455 = vmatpush2.msra.mxu0 0.0
        %456 = vmatprep.subr.mxu0 0.0
        %457 = vmatpush2.msra.mxu0 0.0
        %458 = vmatprep.subr.mxu0 0.0
        %459 = vmatpush2.msra.mxu0 0.0
        %460 = vmatprep.subr.mxu0 0.0
        %461 = vmatpush2.msra.mxu0 0.0
        %462 = vmatprep.subr.mxu0 0.0
        %463 = vmatpush2.msra.mxu0 0.0
        %464 = vmatprep.subr.mxu0 0.0
        %465 = vmatpush2.msra.mxu0 0.0
        %466 = vmatprep.subr.mxu0 0.0
        %467 = vmatpush2.msra.mxu0 0.0
        %468 = vmatprep.subr.mxu0 0.0
        %469 = vmatpush2.msra.mxu0 0.0
        %470 = vmatprep.mubr.f32.mxu0 0.0
        %471 = vmatmul.mubr.f32.gmra.mxu0 %v398
        %v472 = vpop.f32.mrf.mxu0
        %v473 = vadd.f32 %v394, %v472
        %v474 = vpop.f32.mrf.mxu0
        %v475 = vadd.f32 %v394, %v474
        %476 = vdwg.mxu0
        %477 = vmatprep.subr.mxu0 0.0
        %478 = vmatpush1.msra.mxu0 0.0
        %479 = vmatprep.subr.mxu0 0.0
        %480 = vmatpush1.msra.mxu0 0.0
        %481 = vmatprep.subr.mxu0 0.0
        %482 = vmatpush1.msra.mxu0 0.0
        %483 = vmatprep.subr.mxu0 0.0
        %484 = vmatpush1.msra.mxu0 0.0
        %485 = vmatprep.subr.mxu0 0.0
        %486 = vmatpush1.msra.mxu0 0.0
        %487 = vmatprep.subr.mxu0 0.0
        %488 = vmatpush1.msra.mxu0 0.0
        %489 = vmatprep.subr.mxu0 0.0
        %490 = vmatpush1.msra.mxu0 0.0
        %491 = vmatprep.subr.mxu0 0.0
        %492 = vmatpush1.msra.mxu0 0.0
        %493 = vmatprep.subr.mxu0 0.0
        %494 = vmatpush1.msra.mxu0 0.0
        %495 = vmatprep.subr.mxu0 0.0
        %496 = vmatpush1.msra.mxu0 0.0
        %497 = vmatprep.subr.mxu0 0.0
        %498 = vmatpush1.msra.mxu0 0.0
        %499 = vmatprep.subr.mxu0 0.0
        %500 = vmatpush1.msra.mxu0 %v404
        %501 = vmatprep.subr.mxu0 0.0
        %502 = vmatpush1.msra.mxu0 %v390
        %503 = vmatprep.subr.mxu0 0.0
        %504 = vmatpush1.msra.mxu0 %v387
        %505 = vmatprep.subr.mxu0 0.0
        %506 = vmatpush1.msra.mxu0 %v384
        %507 = vmatprep.subr.mxu0 0.0
        %508 = vmatpush1.msra.mxu0 %v381
        %509 = vmatprep.subr.mxu0 0.0
        %510 = vmatpush2.msra.mxu0 0.0
        %511 = vmatprep.subr.mxu0 0.0
        %512 = vmatpush2.msra.mxu0 0.0
        %513 = vmatprep.subr.mxu0 0.0
        %514 = vmatpush2.msra.mxu0 0.0
        %515 = vmatprep.subr.mxu0 0.0
        %516 = vmatpush2.msra.mxu0 0.0
        %517 = vmatprep.subr.mxu0 0.0
        %518 = vmatpush2.msra.mxu0 0.0
        %519 = vmatprep.subr.mxu0 0.0
        %520 = vmatpush2.msra.mxu0 0.0
        %521 = vmatprep.subr.mxu0 0.0
        %522 = vmatpush2.msra.mxu0 0.0
        %523 = vmatprep.subr.mxu0 0.0
        %524 = vmatpush2.msra.mxu0 0.0
        %525 = vmatprep.subr.mxu0 0.0
        %526 = vmatpush2.msra.mxu0 0.0
        %527 = vmatprep.subr.mxu0 0.0
        %528 = vmatpush2.msra.mxu0 0.0
        %529 = vmatprep.subr.mxu0 0.0
        %530 = vmatpush2.msra.mxu0 0.0
        %531 = vmatprep.subr.mxu0 0.0
        %532 = vmatpush2.msra.mxu0 0.0
        %533 = vmatprep.subr.mxu0 0.0
        %534 = vmatpush2.msra.mxu0 0.0
        %535 = vmatprep.subr.mxu0 0.0
        %536 = vmatpush2.msra.mxu0 0.0
        %537 = vmatprep.subr.mxu0 0.0
        %538 = vmatpush2.msra.mxu0 0.0
        %539 = vmatprep.subr.mxu0 0.0
        %540 = vmatpush2.msra.mxu0 0.0
        %541 = vmatprep.mubr.f32.mxu0 0.0
        %542 = vmatmul.mubr.f32.gmra.mxu0 %v398
        %v543 = vpop.f32.mrf.mxu0
        %v544 = vadd.f32 %v394, %v543
        %v545 = vpop.f32.mrf.mxu0
        %546 = vdwg.mxu0
        %v547 = vmax.f32 %v473, 0.0
        %v548 = vmax.f32 %v475, 0.0
        %v549 = vmax.f32 %v544, 0.0
        %v550 = vmul.f32 %v547, %v274
        %v551 = vmul.f32 %v548, %v275
        %v552 = vmul.f32 %v549, %v276
        %v553 = vadd.f32 %v550, %v551
        %vm554 = vcmask 261120
        %v555 = vsel %vm554, %v552, 0.0
        %v556 = vadd.f32 %v553, %v555
        %557 = vadd.xlane.f32.xlu0 %v556
        %v558 = vpop.xlane.xlu0 %557
        %v559 = vmul.f32 %v558, %v215
        %vm560 = vcmask 7168
        %v561 = vsel %vm560, %v559, 0.0
        %v562 = vrot.slane %v561, 4
        %v563 = vadd.f32 %v561, %v562
        %v564 = vrot.slane %v563, 2
        %v565 = vadd.f32 %v563, %v564
        %v566 = vrot.slane %v565, 1
        %v567 = vadd.f32 %v565, %v566
        %569 = vset.pattern.permute.xlu0 0
        %570 = vperm.xlu0 %569, %v567
        %v571 = vpop.permute.xlu0 %570
        %573 = vst [vmem:[%s212] sm:$0x1] %v571
        %s574 = sand.u32 %s118, 1
        %s575 = scalar_lea.sflag [#allocation4], %s574
        %s576 = sand.u32 %s118, 1
        %s577 = scalar_lea.vmem [#allocation5], %s576
        // Predicated region
        $region41: #{tpu_custom_call.1} parent=35 // pred_check
          %p578 = pneg %p128
        $region42: #{tpu_custom_call.1} parent=35 // pred_check_branch
          %580 = sbr.rel (%p578) target = $region44
        $region43: #{tpu_custom_call.1} parent=35 // pred_region
          %s582 = ssub.s32 16, 16
          %583 = vsyncadd %s575, %s582
          %s584 = smul.addr %s21, 16
          %s585 = scalar_lea.hbm %s4, %s584
          %s587 = sshll.u32 %s577, 4
          %s588 = int_to_ptr.vmem [resolvable:$true] %s587
          %590 = dma.vmem_to_hbm [thread:$0]  %s588, 16, %s585, %s575
        $region44: #{tpu_custom_call.1} parent=35 // pred_fallthru
          _
      $region36: #{tpu_custom_call.1} parent=5 // pred_fallthru
        _
      %p591 = scmp.le.s32.totalorder 2, %s16
      // Predicated region
      $region45: #{tpu_custom_call.1} parent=5 // pred_check
        %p592 = pneg %p591
      $region46: #{tpu_custom_call.1} parent=5 // pred_check_branch
        %594 = sbr.rel (%p592) target = $region48
      $region47: #{tpu_custom_call.1} parent=5 // pred_region
        %s595 = ssub.s32 %s16, 2
        // Predicated region
        $region49: #{tpu_custom_call.1} parent=47 // pred_check
          %p596 = pneg %p134
        $region50: #{tpu_custom_call.1} parent=47 // pred_check_branch
          %598 = sbr.rel (%p596) target = $region52
        $region51: #{tpu_custom_call.1} parent=47 // pred_region
          %s599 = sand.u32 %s119, 1
          %s600 = scalar_lea.sflag [#allocation4], %s599
          %s601 = sand.u32 %s119, 1
          %s602 = scalar_lea.vmem [#allocation5], %s601
          %603 = dma.done %s600, 16
        $region52: #{tpu_custom_call.1} parent=47 // pred_fallthru
          _
      $region48: #{tpu_custom_call.1} parent=5 // pred_fallthru
        _
    $region6: #{tpu_custom_call.1} parent=1 // loop_footer
      %s20 = sadd.s32 1, %s16
    $region7: #{tpu_custom_call.1} parent=1 // loop_footer_branch
      %15 = sbr.rel target = $region3
    $region8: #{tpu_custom_call.1} parent=1 // loop_exit
      _
    %604 = vsyncpa [#allocation3], 1
    %s605 = scalar_lea.sflag [#allocation3], 1
    %606 = vsyncpa %s605, 1
    %607 = vsyncpa [#allocation4], 1
    %s608 = scalar_lea.sflag [#allocation4], 1
    %609 = vsyncpa %s608, 1

</llo_original>
